<compile_context>
chip_gen: v7x
topology: tpu7x:2x2x1
jax: 0.10.0
libtpu: 0.0.40
codegen_flags: <defaults>
</compile_context>

<pallas_src>
import functools

import jax
import jax.numpy as jnp
import numpy as np
from jax.experimental import pallas as pl
from jax.experimental.pallas import tpu as pltpu

# ---------------- hyperparameters (small, consistent with the module) --------
VOCAB = 100                # args.embed_num
EMBED_DIM = 32             # args.embed_dim
CLASS_NUM = 4              # args.class_num
KERNEL_NUM = 8             # args.kernel_num
KERNEL_SIZES = (3, 4, 5)   # args.kernel_sizes
BATCH = 2
SEQ_LEN = 16

F_PAD = 128                # lane-dense feature / class width inside the kernel


def _round_up(x, m):
    return (x + m - 1) // m * m


def _cnn_text_kernel(tok_ref,    # (KMAX*N*L_CONV, 1) int32, shifted tokens, -1 sentinel
                     table_ref,  # (V_PAD, D) f32 embedding table (vocab zero-padded)
                     slab_ref,   # (ROWS, F_PAD) f32 packed parameter slab
                     out_ref,    # (N, F_PAD) f32 lane-dense logits (cols >= C are 0)
                     *, n, kmax, l_conv, d,
                     bm_off, mask_off, fcw_off, fcb_off):
    """Embedding gather + all convs (accumulated taps) + ReLU + max-pool + FC."""
    v_pad = table_ref.shape[0]
    f_pad = slab_ref.shape[1]
    blk = n * l_conv
    r = kmax * blk

    # 1) Embedding gather of the tap-shifted tokens as ONE one-hot matmul
    #    (sentinel -1 never matches the iota -> all-zero embedding row).
    tok = tok_ref[...]                                              # (R, 1)
    iota_v = jax.lax.broadcasted_iota(jnp.int32, (r, v_pad), 1)
    onehot = (iota_v == tok).astype(jnp.float32)                    # (R, V_PAD)
    emb = jnp.dot(onehot, table_ref[...],
                  preferred_element_type=jnp.float32)               # (R, D)

    # 2) All three convolutions as kmax accumulated matmuls against per-tap
    #    (D, F_PAD) weight blocks.  Every slice below is a leading-row slice at
    #    a multiple-of-8 offset -> no sublane shifts, no lane-axis concat.
    conv = jnp.zeros((blk, f_pad), jnp.float32)
    for j in range(kmax):
        conv = conv + jnp.dot(emb[j * blk:(j + 1) * blk, :],
                              slab_ref[j * d:(j + 1) * d, :],
                              preferred_element_type=jnp.float32)   # (N*L_CONV, F_PAD)

    # 3) Bias (added once, hoisted out of the tap loop) + ReLU.
    conv = jnp.maximum(conv + slab_ref[bm_off:bm_off + 1, :], 0.0)

    # 4) Precomputed validity mask (zeroing AFTER ReLU is safe: values >= 0 so
    #    the max over valid positions is unchanged), then per-batch global
    #    max-pool at sublane-aligned row offsets i*L_CONV.
    mask = slab_ref[mask_off:mask_off + l_conv, :]                  # (L_CONV, F_PAD)
    pooled = jnp.concatenate(
        [jnp.max(conv[i * l_conv:(i + 1) * l_conv, :] * mask,
                 axis=0, keepdims=True)
         for i in range(n)], axis=0)                                # (N, F_PAD)

    # 5) Final Linear: one matmul + one unmasked, lane-dense full-tile store.
    #    Zero-padded feature rows / class columns contribute exactly 0.
    out_ref[...] = (jnp.dot(pooled, slab_ref[fcw_off:fcw_off + f_pad, :],
                            preferred_element_type=jnp.float32)
                    + slab_ref[fcb_off:fcb_off + 1, :])             # (N, F_PAD)


def cnn_text_forward(tokens, embed_table, conv_ws, conv_bs, fc_w, fc_b):
    """tokens: (N, L) int32.  Returns logits (N, CLASS_NUM) float32."""
    n, seq_len = tokens.shape
    vocab, d = embed_table.shape
    kmax, kmin = max(KERNEL_SIZES), min(KERNEL_SIZES)
    f = len(KERNEL_SIZES) * KERNEL_NUM
    l_conv = _round_up(seq_len - kmin + 1, 8)     # padded conv length (aligned stride)
    v_pad = _round_up(vocab, 128)
    assert f <= F_PAD and CLASS_NUM <= F_PAD and seq_len >= kmax

    # --- tap-shifted token ids (trace-time); -1 sentinel => zero embedding ---
    tok = tokens.astype(jnp.int32)
    pad_len = l_conv + kmax - 1
    tok_pad = jnp.concatenate(
        [tok, jnp.full((n, pad_len - seq_len), -1, jnp.int32)], axis=1)
    tok_sh = jnp.stack([tok_pad[:, j:j + l_conv] for j in range(kmax)], axis=0)
    tok_flat = tok_sh.reshape(kmax * n * l_conv, 1)               # (KMAX*N*L_CONV, 1)

    # --- vocab-padded embedding table (stays VMEM-resident) ------------------
    table = jnp.zeros((v_pad, d), jnp.float32).at[:vocab].set(
        embed_table.astype(jnp.float32))

    # --- ONE packed parameter slab; every section start is a multiple of 8 ---
    bm_off = _round_up(kmax * d, 8)               # merged conv bias row
    mask_off = bm_off + 8                         # (l_conv, F_PAD) validity mask
    fcw_off = mask_off + l_conv                   # (F_PAD, F_PAD) fc weight block
    fcb_off = fcw_off + F_PAD                     # fc bias row
    rows = fcb_off + 8
    slab = jnp.zeros((rows, F_PAD), jnp.float32)
    for g, (w, b, k) in enumerate(zip(conv_ws, conv_bs, KERNEL_SIZES)):
        c0 = g * KERNEL_NUM
        wt = jnp.transpose(w.astype(jnp.float32), (1, 2, 0)).reshape(k * d, KERNEL_NUM)
        slab = slab.at[:k * d, c0:c0 + KERNEL_NUM].set(wt)        # taps j >= k stay 0
        slab = slab.at[bm_off, c0:c0 + KERNEL_NUM].set(b.astype(jnp.float32))
        slab = slab.at[mask_off:mask_off + (seq_len - k + 1),
                       c0:c0 + KERNEL_NUM].set(1.0)               # valid output rows
    slab = slab.at[fcw_off:fcw_off + f, :CLASS_NUM].set(
        jnp.transpose(fc_w).astype(jnp.float32))
    slab = slab.at[fcb_off, :CLASS_NUM].set(fc_b.astype(jnp.float32))

    kernel = functools.partial(
        _cnn_text_kernel, n=n, kmax=kmax, l_conv=l_conv, d=d,
        bm_off=bm_off, mask_off=mask_off, fcw_off=fcw_off, fcb_off=fcb_off)
    vmem = pl.BlockSpec(memory_space=pltpu.MemorySpace.VMEM)
    out = pl.pallas_call(
        kernel,
        out_shape=jax.ShapeDtypeStruct((n, F_PAD), jnp.float32),
        in_specs=[vmem, vmem, vmem],
        out_specs=vmem,
    )(tok_flat, table, slab)
    return out[:, :CLASS_NUM]


def cnn_text_reference(tokens, embed_table, conv_ws, conv_bs, fc_w, fc_b):
    """Pure-JAX reference matching the PyTorch forward (eval mode)."""
    emb = jnp.take(embed_table, tokens, axis=0)           # (N, L, D)
    n, seq_len, _ = emb.shape
    feats = []
    for w, b in zip(conv_ws, conv_bs):                    # w: (K_NUM, k, D)
        k = w.shape[1]
        l_out = seq_len - k + 1
        windows = jnp.stack([emb[:, j:j + l_out, :] for j in range(k)], axis=2)
        conv = jnp.einsum("nlkd,ckd->nlc", windows, w) + b  # (N, Lout, K_NUM)
        conv = jnp.maximum(conv, 0.0)
        feats.append(jnp.max(conv, axis=1))               # (N, K_NUM)
    feat = jnp.concatenate(feats, axis=1)                 # (N, 3*K_NUM)
    return feat @ fc_w.T + fc_b                           # (N, CLASS_NUM)


if __name__ == "__main__":
    key = jax.random.PRNGKey(0)
    keys = jax.random.split(key, 2 + 2 * len(KERNEL_SIZES) + 2)

    # Deterministic synthetic parameters (shapes follow the module __init__).
    embed_table = jax.random.normal(keys[0], (VOCAB, EMBED_DIM), jnp.float32) * 0.1
    conv_ws, conv_bs = [], []
    for idx, k in enumerate(KERNEL_SIZES):
        conv_ws.append(jax.random.normal(keys[2 + 2 * idx],
                                         (KERNEL_NUM, k, EMBED_DIM),
                                         jnp.float32) * 0.1)
        conv_bs.append(jax.random.normal(keys[3 + 2 * idx],
                                         (KERNEL_NUM,), jnp.float32) * 0.01)
    fc_w = jax.random.normal(keys[-2],
                             (CLASS_NUM, len(KERNEL_SIZES) * KERNEL_NUM),
                             jnp.float32) * 0.1
    fc_b = jax.random.normal(keys[-1], (CLASS_NUM,), jnp.float32) * 0.01

    # Deterministic example input: integer token ids, shape (BATCH, SEQ_LEN).
    tokens = jax.random.randint(keys[1], (BATCH, SEQ_LEN), 0, VOCAB, jnp.int32)

    logits = cnn_text_forward(tokens, embed_table, conv_ws, conv_bs, fc_w, fc_b)
    logits = jax.block_until_ready(logits)

    ref = cnn_text_reference(tokens, embed_table, conv_ws, conv_bs, fc_w, fc_b)
    np.testing.assert_allclose(np.asarray(logits), np.asarray(ref),
                               rtol=1e-4, atol=1e-4)
    assert logits.shape == (BATCH, CLASS_NUM)
    print("KERNEL_OK")
</pallas_src>

<mosaic_0001>
module attributes {stable_mosaic.version = 11 : i64} {
  func.func @_cnn_text_kernel(%arg0: memref<160x1xi32, #tpu.memory_space<vmem>>, %arg1: memref<128x32xf32, #tpu.memory_space<vmem>>, %arg2: memref<320x128xf32, #tpu.memory_space<vmem>>, %arg3: memref<2x128xf32, #tpu.memory_space<vmem>>) attributes {dimension_semantics = [], scalar_prefetch = 0 : i64, scratch_operands = 0 : i64, tpu.core_type = #tpu.core_type<tc>} {
    %c0 = arith.constant 0 : index
    %c0_0 = arith.constant 0 : index
    %0 = vector.load %arg0[%c0, %c0_0] : memref<160x1xi32, #tpu.memory_space<vmem>>, vector<160x1xi32>
    %1 = tpu.iota {dimensions = array<i32: 1>} : vector<160x128xi32>
    %2 = vector.broadcast %0 : vector<160x1xi32> to vector<160x128xi32>
    %3 = arith.cmpi eq, %1, %2 : vector<160x128xi32>
    %4 = arith.extui %3 : vector<160x128xi1> to vector<160x128xi32>
    %5 = arith.sitofp %4 : vector<160x128xi32> to vector<160x128xf32>
    %c0_1 = arith.constant 0 : index
    %c0_2 = arith.constant 0 : index
    %6 = vector.load %arg1[%c0_1, %c0_2] : memref<128x32xf32, #tpu.memory_space<vmem>>, vector<128x32xf32>
    %cst = arith.constant dense<0.000000e+00> : vector<160x32xf32>
    %7 = tpu.matmul %5, %6, %cst {dimension_numbers = #tpu.dot_dimension_numbers<[1], [0], [0], [1], [0, 0, 1, 1], [], []>} : vector<160x128xf32>, vector<128x32xf32>, vector<160x32xf32> -> vector<160x32xf32>
    %cst_3 = arith.constant 0.000000e+00 : f32
    %8 = vector.broadcast %cst_3 : f32 to vector<32x128xf32>
    %9 = vector.extract_strided_slice %7 {offsets = [0, 0], sizes = [32, 32], strides = [1, 1]} : vector<160x32xf32> to vector<32x32xf32>
    %c0_4 = arith.constant 0 : index
    %c0_5 = arith.constant 0 : index
    %10 = vector.load %arg2[%c0_4, %c0_5] : memref<320x128xf32, #tpu.memory_space<vmem>>, vector<32x128xf32>
    %cst_6 = arith.constant dense<0.000000e+00> : vector<32x128xf32>
    %11 = tpu.matmul %9, %10, %cst_6 {dimension_numbers = #tpu.dot_dimension_numbers<[1], [0], [0], [1], [0, 0, 1, 1], [], []>} : vector<32x32xf32>, vector<32x128xf32>, vector<32x128xf32> -> vector<32x128xf32>
    %12 = arith.addf %8, %11 : vector<32x128xf32>
    %13 = vector.extract_strided_slice %7 {offsets = [32, 0], sizes = [32, 32], strides = [1, 1]} : vector<160x32xf32> to vector<32x32xf32>
    %c32 = arith.constant 32 : index
    %c0_7 = arith.constant 0 : index
    %14 = vector.load %arg2[%c32, %c0_7] : memref<320x128xf32, #tpu.memory_space<vmem>>, vector<32x128xf32>
    %cst_8 = arith.constant dense<0.000000e+00> : vector<32x128xf32>
    %15 = tpu.matmul %13, %14, %cst_8 {dimension_numbers = #tpu.dot_dimension_numbers<[1], [0], [0], [1], [0, 0, 1, 1], [], []>} : vector<32x32xf32>, vector<32x128xf32>, vector<32x128xf32> -> vector<32x128xf32>
    %16 = arith.addf %12, %15 : vector<32x128xf32>
    %17 = vector.extract_strided_slice %7 {offsets = [64, 0], sizes = [32, 32], strides = [1, 1]} : vector<160x32xf32> to vector<32x32xf32>
    %c64 = arith.constant 64 : index
    %c0_9 = arith.constant 0 : index
    %18 = vector.load %arg2[%c64, %c0_9] : memref<320x128xf32, #tpu.memory_space<vmem>>, vector<32x128xf32>
    %cst_10 = arith.constant dense<0.000000e+00> : vector<32x128xf32>
    %19 = tpu.matmul %17, %18, %cst_10 {dimension_numbers = #tpu.dot_dimension_numbers<[1], [0], [0], [1], [0, 0, 1, 1], [], []>} : vector<32x32xf32>, vector<32x128xf32>, vector<32x128xf32> -> vector<32x128xf32>
    %20 = arith.addf %16, %19 : vector<32x128xf32>
    %21 = vector.extract_strided_slice %7 {offsets = [96, 0], sizes = [32, 32], strides = [1, 1]} : vector<160x32xf32> to vector<32x32xf32>
    %c96 = arith.constant 96 : index
    %c0_11 = arith.constant 0 : index
    %22 = vector.load %arg2[%c96, %c0_11] : memref<320x128xf32, #tpu.memory_space<vmem>>, vector<32x128xf32>
    %cst_12 = arith.constant dense<0.000000e+00> : vector<32x128xf32>
    %23 = tpu.matmul %21, %22, %cst_12 {dimension_numbers = #tpu.dot_dimension_numbers<[1], [0], [0], [1], [0, 0, 1, 1], [], []>} : vector<32x32xf32>, vector<32x128xf32>, vector<32x128xf32> -> vector<32x128xf32>
    %24 = arith.addf %20, %23 : vector<32x128xf32>
    %25 = vector.extract_strided_slice %7 {offsets = [128, 0], sizes = [32, 32], strides = [1, 1]} : vector<160x32xf32> to vector<32x32xf32>
    %c128 = arith.constant 128 : index
    %c0_13 = arith.constant 0 : index
    %26 = vector.load %arg2[%c128, %c0_13] : memref<320x128xf32, #tpu.memory_space<vmem>>, vector<32x128xf32>
    %cst_14 = arith.constant dense<0.000000e+00> : vector<32x128xf32>
    %27 = tpu.matmul %25, %26, %cst_14 {dimension_numbers = #tpu.dot_dimension_numbers<[1], [0], [0], [1], [0, 0, 1, 1], [], []>} : vector<32x32xf32>, vector<32x128xf32>, vector<32x128xf32> -> vector<32x128xf32>
    %28 = arith.addf %24, %27 : vector<32x128xf32>
    %c160 = arith.constant 160 : index
    %c0_15 = arith.constant 0 : index
    %29 = vector.load %arg2[%c160, %c0_15] : memref<320x128xf32, #tpu.memory_space<vmem>>, vector<1x128xf32>
    %30 = vector.broadcast %29 : vector<1x128xf32> to vector<32x128xf32>
    %31 = arith.addf %28, %30 : vector<32x128xf32>
    %cst_16 = arith.constant 0.000000e+00 : f32
    %32 = vector.broadcast %cst_16 : f32 to vector<32x128xf32>
    %33 = arith.maximumf %31, %32 : vector<32x128xf32>
    %c168 = arith.constant 168 : index
    %c0_17 = arith.constant 0 : index
    %34 = vector.load %arg2[%c168, %c0_17] : memref<320x128xf32, #tpu.memory_space<vmem>>, vector<16x128xf32>
    %35 = vector.extract_strided_slice %33 {offsets = [0, 0], sizes = [16, 128], strides = [1, 1]} : vector<32x128xf32> to vector<16x128xf32>
    %36 = arith.mulf %35, %34 : vector<16x128xf32>
    %cst_18 = arith.constant dense<0xFF800000> : vector<128xf32>
    %37 = vector.multi_reduction <maximumf>, %36, %cst_18 [0] : vector<16x128xf32> to vector<128xf32>
    %38 = vector.shape_cast %37 : vector<128xf32> to vector<1x128xf32>
    %39 = vector.extract_strided_slice %33 {offsets = [16, 0], sizes = [16, 128], strides = [1, 1]} : vector<32x128xf32> to vector<16x128xf32>
    %40 = arith.mulf %39, %34 : vector<16x128xf32>
    %cst_19 = arith.constant dense<0xFF800000> : vector<128xf32>
    %41 = vector.multi_reduction <maximumf>, %40, %cst_19 [0] : vector<16x128xf32> to vector<128xf32>
    %42 = vector.shape_cast %41 : vector<128xf32> to vector<1x128xf32>
    %43 = tpu.concatenate %38, %42 in 0 : vector<1x128xf32>, vector<1x128xf32> -> vector<2x128xf32>
    %c184 = arith.constant 184 : index
    %c0_20 = arith.constant 0 : index
    %44 = vector.load %arg2[%c184, %c0_20] : memref<320x128xf32, #tpu.memory_space<vmem>>, vector<128x128xf32>
    %cst_21 = arith.constant dense<0.000000e+00> : vector<2x128xf32>
    %45 = tpu.matmul %43, %44, %cst_21 {dimension_numbers = #tpu.dot_dimension_numbers<[1], [0], [0], [1], [0, 0, 1, 1], [], []>} : vector<2x128xf32>, vector<128x128xf32>, vector<2x128xf32> -> vector<2x128xf32>
    %c312 = arith.constant 312 : index
    %c0_22 = arith.constant 0 : index
    %46 = vector.load %arg2[%c312, %c0_22] : memref<320x128xf32, #tpu.memory_space<vmem>>, vector<1x128xf32>
    %47 = vector.broadcast %46 : vector<1x128xf32> to vector<2x128xf32>
    %48 = arith.addf %45, %47 : vector<2x128xf32>
    %c0_23 = arith.constant 0 : index
    %c0_24 = arith.constant 0 : index
    %49 = vector.load %arg3[%c0_23, %c0_24] : memref<2x128xf32, #tpu.memory_space<vmem>>, vector<2x128xf32>
    tpu.vector_store %arg3[%c0_23, %c0_24], %48 {strides = array<i32>} : memref<2x128xf32, #tpu.memory_space<vmem>>, vector<2x128xf32>,
    return
  }
}

</mosaic_0001>

<llo_original>
// kernel: tpu_custom_call.1
$region0: #{tpu_custom_call.1}
  #allocation0 [shape = 'u32[]', space=smem, size = 0x4, offset = 0x4, fixed_abs, tag = 'smem constant byte address 0x4 - core index']
  #allocation1 [shape = 'u32[144,128]{1,0:T(1,128)}', space=vmem, size = 0x12000, scoped, tag = 'internal scratch']
  %s0 = inlined_call_operand.vmem [shape: s32[160,1], index: 0, kind: input, shape index: {}]
  %s1 = inlined_call_operand.vmem [shape: f32[128,32], index: 1, kind: input, shape index: {}]
  %s2 = inlined_call_operand.vmem [shape: f32[320,128], index: 2, kind: input, shape index: {}]
  %s3 = inlined_call_operand.hbm [shape: f32[2,128], index: 3, kind: output, shape index: {}]
  %s4 = sld [smem:[#allocation0]]
  $region22: #{tpu_custom_call.1} parent=0
    _
  %s6 = ssub.s32 1, %s4
  %s7 = scalar_select 0, %s6, %s4
  $region1: #{tpu_custom_call.1} parent=0
    #allocation2 [shape = 'u8[1024]{0}', space=vmem, size = 0x400, scoped, tag = 'output window, operand 0, single buffered']
    #allocation3 [shape = 's32[1]{0}', space=sflag, size = 0x4, scoped, tag = 'scoped memory for tpu_custom_call.1']
    %8 = vsyncpa [#allocation3], 0
    // Predicated region
    $region2: #{tpu_custom_call.1} parent=1 // pred_check
      _
    $region3: #{tpu_custom_call.1} parent=1 // pred_check_branch
      %10 = sbr.rel (0) target = $region5
    $region4: #{tpu_custom_call.1} parent=1 // pred_region
      _
    $region5: #{tpu_custom_call.1} parent=1 // pred_fallthru
      _
    // Predicated region
    $region6: #{tpu_custom_call.1} parent=1 // pred_check
      _
    $region7: #{tpu_custom_call.1} parent=1 // pred_check_branch
      %12 = sbr.rel (0) target = $region9
    $region8: #{tpu_custom_call.1} parent=1 // pred_region
      _
    $region9: #{tpu_custom_call.1} parent=1 // pred_fallthru
      _
    // Predicated region
    $region10: #{tpu_custom_call.1} parent=1 // pred_check
      _
    $region11: #{tpu_custom_call.1} parent=1 // pred_check_branch
      %14 = sbr.rel (0) target = $region13
    $region12: #{tpu_custom_call.1} parent=1 // pred_region
      _
    $region13: #{tpu_custom_call.1} parent=1 // pred_fallthru
      _
    %v15 = vld [vmem:[%s0] sm:$0xff]
    %v16 = vld [vmem:[%s0 + $0x8] sm:$0xff]
    %v17 = vld [vmem:[%s0 + $0x10] sm:$0xff]
    %v18 = vld [vmem:[%s0 + $0x18] sm:$0xff]
    %v19 = vld [vmem:[%s0 + $0x20] sm:$0xff]
    %v20 = vld [vmem:[%s0 + $0x28] sm:$0xff]
    %v21 = vld [vmem:[%s0 + $0x30] sm:$0xff]
    %v22 = vld [vmem:[%s0 + $0x38] sm:$0xff]
    %v23 = vld [vmem:[%s0 + $0x40] sm:$0xff]
    %v24 = vld [vmem:[%s0 + $0x48] sm:$0xff]
    %v25 = vld [vmem:[%s0 + $0x50] sm:$0xff]
    %v26 = vld [vmem:[%s0 + $0x58] sm:$0xff]
    %v27 = vld [vmem:[%s0 + $0x60] sm:$0xff]
    %v28 = vld [vmem:[%s0 + $0x68] sm:$0xff]
    %v29 = vld [vmem:[%s0 + $0x70] sm:$0xff]
    %v30 = vld [vmem:[%s0 + $0x78] sm:$0xff]
    %v31 = vld [vmem:[%s0 + $0x80] sm:$0xff]
    %v32 = vld [vmem:[%s0 + $0x88] sm:$0xff]
    %v33 = vld [vmem:[%s0 + $0x90] sm:$0xff]
    %v34 = vld [vmem:[%s0 + $0x98] sm:$0xff]
    %v35 = vlaneseq
    %v36 = vand.u32 %v35, 127
    %37 = vset.pattern.permute.xlu0 0
    %38 = vperm.xlu0 %37, %v15
    %v39 = vpop.permute.xlu0 %38
    %40 = vset.pattern.permute.xlu0 0
    %41 = vperm.xlu0 %40, %v16
    %v42 = vpop.permute.xlu0 %41
    %43 = vset.pattern.permute.xlu0 0
    %44 = vperm.xlu0 %43, %v17
    %v45 = vpop.permute.xlu0 %44
    %46 = vset.pattern.permute.xlu0 0
    %47 = vperm.xlu0 %46, %v18
    %v48 = vpop.permute.xlu0 %47
    %49 = vset.pattern.permute.xlu0 0
    %50 = vperm.xlu0 %49, %v19
    %v51 = vpop.permute.xlu0 %50
    %52 = vset.pattern.permute.xlu0 0
    %53 = vperm.xlu0 %52, %v20
    %v54 = vpop.permute.xlu0 %53
    %55 = vset.pattern.permute.xlu0 0
    %56 = vperm.xlu0 %55, %v21
    %v57 = vpop.permute.xlu0 %56
    %58 = vset.pattern.permute.xlu0 0
    %59 = vperm.xlu0 %58, %v22
    %v60 = vpop.permute.xlu0 %59
    %61 = vset.pattern.permute.xlu0 0
    %62 = vperm.xlu0 %61, %v23
    %v63 = vpop.permute.xlu0 %62
    %64 = vset.pattern.permute.xlu0 0
    %65 = vperm.xlu0 %64, %v24
    %v66 = vpop.permute.xlu0 %65
    %67 = vset.pattern.permute.xlu0 0
    %68 = vperm.xlu0 %67, %v25
    %v69 = vpop.permute.xlu0 %68
    %70 = vset.pattern.permute.xlu0 0
    %71 = vperm.xlu0 %70, %v26
    %v72 = vpop.permute.xlu0 %71
    %73 = vset.pattern.permute.xlu0 0
    %74 = vperm.xlu0 %73, %v27
    %v75 = vpop.permute.xlu0 %74
    %76 = vset.pattern.permute.xlu0 0
    %77 = vperm.xlu0 %76, %v28
    %v78 = vpop.permute.xlu0 %77
    %79 = vset.pattern.permute.xlu0 0
    %80 = vperm.xlu0 %79, %v29
    %v81 = vpop.permute.xlu0 %80
    %82 = vset.pattern.permute.xlu0 0
    %83 = vperm.xlu0 %82, %v30
    %v84 = vpop.permute.xlu0 %83
    %85 = vset.pattern.permute.xlu0 0
    %86 = vperm.xlu0 %85, %v31
    %v87 = vpop.permute.xlu0 %86
    %88 = vset.pattern.permute.xlu0 0
    %89 = vperm.xlu0 %88, %v32
    %v90 = vpop.permute.xlu0 %89
    %91 = vset.pattern.permute.xlu0 0
    %92 = vperm.xlu0 %91, %v33
    %v93 = vpop.permute.xlu0 %92
    %94 = vset.pattern.permute.xlu0 0
    %95 = vperm.xlu0 %94, %v34
    %v96 = vpop.permute.xlu0 %95
    %vm97 = vcmp.eq.s32.totalorder %v36, %v39
    %vm98 = vcmp.eq.s32.totalorder %v36, %v42
    %vm99 = vcmp.eq.s32.totalorder %v36, %v45
    %vm100 = vcmp.eq.s32.totalorder %v36, %v48
    %vm101 = vcmp.eq.s32.totalorder %v36, %v51
    %vm102 = vcmp.eq.s32.totalorder %v36, %v54
    %vm103 = vcmp.eq.s32.totalorder %v36, %v57
    %vm104 = vcmp.eq.s32.totalorder %v36, %v60
    %vm105 = vcmp.eq.s32.totalorder %v36, %v63
    %vm106 = vcmp.eq.s32.totalorder %v36, %v66
    %vm107 = vcmp.eq.s32.totalorder %v36, %v69
    %vm108 = vcmp.eq.s32.totalorder %v36, %v72
    %vm109 = vcmp.eq.s32.totalorder %v36, %v75
    %vm110 = vcmp.eq.s32.totalorder %v36, %v78
    %vm111 = vcmp.eq.s32.totalorder %v36, %v81
    %vm112 = vcmp.eq.s32.totalorder %v36, %v84
    %vm113 = vcmp.eq.s32.totalorder %v36, %v87
    %vm114 = vcmp.eq.s32.totalorder %v36, %v90
    %vm115 = vcmp.eq.s32.totalorder %v36, %v93
    %vm116 = vcmp.eq.s32.totalorder %v36, %v96
    %v117 = vsel %vm97, 1, 0
    %v118 = vsel %vm98, 1, 0
    %v119 = vsel %vm99, 1, 0
    %v120 = vsel %vm100, 1, 0
    %v121 = vsel %vm101, 1, 0
    %v122 = vsel %vm102, 1, 0
    %v123 = vsel %vm103, 1, 0
    %v124 = vsel %vm104, 1, 0
    %v125 = vsel %vm105, 1, 0
    %v126 = vsel %vm106, 1, 0
    %v127 = vsel %vm107, 1, 0
    %v128 = vsel %vm108, 1, 0
    %v129 = vsel %vm109, 1, 0
    %v130 = vsel %vm110, 1, 0
    %v131 = vsel %vm111, 1, 0
    %v132 = vsel %vm112, 1, 0
    %v133 = vsel %vm113, 1, 0
    %v134 = vsel %vm114, 1, 0
    %v135 = vsel %vm115, 1, 0
    %v136 = vsel %vm116, 1, 0
    %v137 = vcvt.s32.f32 %v117
    %v138 = vcvt.s32.f32 %v118
    %v139 = vcvt.s32.f32 %v119
    %v140 = vcvt.s32.f32 %v120
    %v141 = vcvt.s32.f32 %v121
    %v142 = vcvt.s32.f32 %v122
    %v143 = vcvt.s32.f32 %v123
    %v144 = vcvt.s32.f32 %v124
    %v145 = vcvt.s32.f32 %v125
    %v146 = vcvt.s32.f32 %v126
    %v147 = vcvt.s32.f32 %v127
    %v148 = vcvt.s32.f32 %v128
    %v149 = vcvt.s32.f32 %v129
    %v150 = vcvt.s32.f32 %v130
    %v151 = vcvt.s32.f32 %v131
    %v152 = vcvt.s32.f32 %v132
    %v153 = vcvt.s32.f32 %v133
    %v154 = vcvt.s32.f32 %v134
    %v155 = vcvt.s32.f32 %v135
    %v156 = vcvt.s32.f32 %v136
    %v157 = vld [vmem:[%s1] sm:$0xff]
    %v158 = vld [vmem:[%s1 + $0x8] sm:$0xff]
    %v159 = vld [vmem:[%s1 + $0x10] sm:$0xff]
    %v160 = vld [vmem:[%s1 + $0x18] sm:$0xff]
    %v161 = vld [vmem:[%s1 + $0x20] sm:$0xff]
    %v162 = vld [vmem:[%s1 + $0x28] sm:$0xff]
    %v163 = vld [vmem:[%s1 + $0x30] sm:$0xff]
    %v164 = vld [vmem:[%s1 + $0x38] sm:$0xff]
    %v165 = vld [vmem:[%s1 + $0x40] sm:$0xff]
    %v166 = vld [vmem:[%s1 + $0x48] sm:$0xff]
    %v167 = vld [vmem:[%s1 + $0x50] sm:$0xff]
    %v168 = vld [vmem:[%s1 + $0x58] sm:$0xff]
    %v169 = vld [vmem:[%s1 + $0x60] sm:$0xff]
    %v170 = vld [vmem:[%s1 + $0x68] sm:$0xff]
    %v171 = vld [vmem:[%s1 + $0x70] sm:$0xff]
    %v172 = vld [vmem:[%s1 + $0x78] sm:$0xff]
    %173 = vmatprep.subr.mxu0 0.0
    %174 = vmatpush1.msra.mxu0 %v157
    %175 = vmatprep.subr.mxu0 0.0
    %176 = vmatpush1.msra.mxu0 %v158
    %177 = vmatprep.subr.mxu0 0.0
    %178 = vmatpush1.msra.mxu0 %v159
    %179 = vmatprep.subr.mxu0 0.0
    %180 = vmatpush1.msra.mxu0 %v160
    %181 = vmatprep.subr.mxu0 0.0
    %182 = vmatpush1.msra.mxu0 %v161
    %183 = vmatprep.subr.mxu0 0.0
    %184 = vmatpush1.msra.mxu0 %v162
    %185 = vmatprep.subr.mxu0 0.0
    %186 = vmatpush1.msra.mxu0 %v163
    %187 = vmatprep.subr.mxu0 0.0
    %188 = vmatpush1.msra.mxu0 %v164
    %189 = vmatprep.subr.mxu0 0.0
    %190 = vmatpush1.msra.mxu0 %v165
    %191 = vmatprep.subr.mxu0 0.0
    %192 = vmatpush1.msra.mxu0 %v166
    %193 = vmatprep.subr.mxu0 0.0
    %194 = vmatpush1.msra.mxu0 %v167
    %195 = vmatprep.subr.mxu0 0.0
    %196 = vmatpush1.msra.mxu0 %v168
    %197 = vmatprep.subr.mxu0 0.0
    %198 = vmatpush1.msra.mxu0 %v169
    %199 = vmatprep.subr.mxu0 0.0
    %200 = vmatpush1.msra.mxu0 %v170
    %201 = vmatprep.subr.mxu0 0.0
    %202 = vmatpush1.msra.mxu0 %v171
    %203 = vmatprep.subr.mxu0 0.0
    %204 = vmatpush1.msra.mxu0 %v172
    %205 = vmatprep.subr.mxu0 0.0
    %206 = vmatpush1.msra.mxu0 0.0
    %207 = vmatprep.subr.mxu0 0.0
    %208 = vmatpush1.msra.mxu0 0.0
    %209 = vmatprep.subr.mxu0 0.0
    %210 = vmatpush1.msra.mxu0 0.0
    %211 = vmatprep.subr.mxu0 0.0
    %212 = vmatpush1.msra.mxu0 0.0
    %213 = vmatprep.subr.mxu0 0.0
    %214 = vmatpush1.msra.mxu0 0.0
    %215 = vmatprep.subr.mxu0 0.0
    %216 = vmatpush1.msra.mxu0 0.0
    %217 = vmatprep.subr.mxu0 0.0
    %218 = vmatpush1.msra.mxu0 0.0
    %219 = vmatprep.subr.mxu0 0.0
    %220 = vmatpush1.msra.mxu0 0.0
    %221 = vmatprep.subr.mxu0 0.0
    %222 = vmatpush1.msra.mxu0 0.0
    %223 = vmatprep.subr.mxu0 0.0
    %224 = vmatpush1.msra.mxu0 0.0
    %225 = vmatprep.subr.mxu0 0.0
    %226 = vmatpush1.msra.mxu0 0.0
    %227 = vmatprep.subr.mxu0 0.0
    %228 = vmatpush1.msra.mxu0 0.0
    %229 = vmatprep.subr.mxu0 0.0
    %230 = vmatpush1.msra.mxu0 0.0
    %231 = vmatprep.subr.mxu0 0.0
    %232 = vmatpush1.msra.mxu0 0.0
    %233 = vmatprep.subr.mxu0 0.0
    %234 = vmatpush1.msra.mxu0 0.0
    %235 = vmatprep.subr.mxu0 0.0
    %236 = vmatpush1.msra.mxu0 0.0
    %237 = vmatprep.mubr.f32.mxu0 0.0
    %238 = vmatmul.mubr.f32.gmra.mrb[0].mxu0 %v137
    %v239 = vpop.f32.mrb[0].mxu0
    %v240 = vadd.f32 0.0, %v239
    %v241 = vpop.f32.mrb[0].mxu0
    %242 = vmatprep.mubr.f32.mxu0 0.0
    %243 = vmatmul.mubr.f32.gmra.mrb[0].mxu0 %v138
    %v244 = vpop.f32.mrb[0].mxu0
    %v245 = vadd.f32 0.0, %v244
    %v246 = vpop.f32.mrb[0].mxu0
    %247 = vmatprep.mubr.f32.mxu0 0.0
    %248 = vmatmul.mubr.f32.gmra.mrb[0].mxu0 %v139
    %v249 = vpop.f32.mrb[0].mxu0
    %v250 = vadd.f32 0.0, %v249
    %v251 = vpop.f32.mrb[0].mxu0
    %252 = vmatprep.mubr.f32.mxu0 0.0
    %253 = vmatmul.mubr.f32.gmra.mrb[0].mxu0 %v140
    %v254 = vpop.f32.mrb[0].mxu0
    %v255 = vadd.f32 0.0, %v254
    %v256 = vpop.f32.mrb[0].mxu0
    %257 = vmatprep.mubr.f32.mxu0 0.0
    %258 = vmatmul.mubr.f32.gmra.mrb[0].mxu0 %v141
    %v259 = vpop.f32.mrb[0].mxu0
    %v260 = vadd.f32 0.0, %v259
    %v261 = vpop.f32.mrb[0].mxu0
    %262 = vmatprep.mubr.f32.mxu0 0.0
    %263 = vmatmul.mubr.f32.gmra.mrb[0].mxu0 %v142
    %v264 = vpop.f32.mrb[0].mxu0
    %v265 = vadd.f32 0.0, %v264
    %v266 = vpop.f32.mrb[0].mxu0
    %267 = vmatprep.mubr.f32.mxu0 0.0
    %268 = vmatmul.mubr.f32.gmra.mrb[0].mxu0 %v143
    %v269 = vpop.f32.mrb[0].mxu0
    %v270 = vadd.f32 0.0, %v269
    %v271 = vpop.f32.mrb[0].mxu0
    %272 = vmatprep.mubr.f32.mxu0 0.0
    %273 = vmatmul.mubr.f32.gmra.mrb[0].mxu0 %v144
    %v274 = vpop.f32.mrb[0].mxu0
    %v275 = vadd.f32 0.0, %v274
    %v276 = vpop.f32.mrb[0].mxu0
    %277 = vmatprep.mubr.f32.mxu0 0.0
    %278 = vmatmul.mubr.f32.gmra.mrb[0].mxu0 %v145
    %v279 = vpop.f32.mrb[0].mxu0
    %v280 = vadd.f32 0.0, %v279
    %v281 = vpop.f32.mrb[0].mxu0
    %282 = vmatprep.mubr.f32.mxu0 0.0
    %283 = vmatmul.mubr.f32.gmra.mrb[0].mxu0 %v146
    %v284 = vpop.f32.mrb[0].mxu0
    %v285 = vadd.f32 0.0, %v284
    %v286 = vpop.f32.mrb[0].mxu0
    %287 = vmatprep.mubr.f32.mxu0 0.0
    %288 = vmatmul.mubr.f32.gmra.mrb[0].mxu0 %v147
    %v289 = vpop.f32.mrb[0].mxu0
    %v290 = vadd.f32 0.0, %v289
    %v291 = vpop.f32.mrb[0].mxu0
    %292 = vmatprep.mubr.f32.mxu0 0.0
    %293 = vmatmul.mubr.f32.gmra.mrb[0].mxu0 %v148
    %v294 = vpop.f32.mrb[0].mxu0
    %v295 = vadd.f32 0.0, %v294
    %v296 = vpop.f32.mrb[0].mxu0
    %297 = vmatprep.mubr.f32.mxu0 0.0
    %298 = vmatmul.mubr.f32.gmra.mrb[0].mxu0 %v149
    %v299 = vpop.f32.mrb[0].mxu0
    %v300 = vadd.f32 0.0, %v299
    %v301 = vpop.f32.mrb[0].mxu0
    %302 = vmatprep.mubr.f32.mxu0 0.0
    %303 = vmatmul.mubr.f32.gmra.mrb[0].mxu0 %v150
    %v304 = vpop.f32.mrb[0].mxu0
    %v305 = vadd.f32 0.0, %v304
    %v306 = vpop.f32.mrb[0].mxu0
    %307 = vmatprep.mubr.f32.mxu0 0.0
    %308 = vmatmul.mubr.f32.gmra.mrb[0].mxu0 %v151
    %v309 = vpop.f32.mrb[0].mxu0
    %v310 = vadd.f32 0.0, %v309
    %v311 = vpop.f32.mrb[0].mxu0
    %312 = vmatprep.mubr.f32.mxu0 0.0
    %313 = vmatmul.mubr.f32.gmra.mrb[0].mxu0 %v152
    %v314 = vpop.f32.mrb[0].mxu0
    %v315 = vadd.f32 0.0, %v314
    %v316 = vpop.f32.mrb[0].mxu0
    %317 = vmatprep.mubr.f32.mxu0 0.0
    %318 = vmatmul.mubr.f32.gmra.mrb[0].mxu0 %v153
    %v319 = vpop.f32.mrb[0].mxu0
    %v320 = vadd.f32 0.0, %v319
    %v321 = vpop.f32.mrb[0].mxu0
    %322 = vmatprep.mubr.f32.mxu0 0.0
    %323 = vmatmul.mubr.f32.gmra.mrb[0].mxu0 %v154
    %v324 = vpop.f32.mrb[0].mxu0
    %v325 = vadd.f32 0.0, %v324
    %v326 = vpop.f32.mrb[0].mxu0
    %327 = vmatprep.mubr.f32.mxu0 0.0
    %328 = vmatmul.mubr.f32.gmra.mrb[0].mxu0 %v155
    %v329 = vpop.f32.mrb[0].mxu0
    %v330 = vadd.f32 0.0, %v329
    %v331 = vpop.f32.mrb[0].mxu0
    %332 = vmatprep.mubr.f32.mxu0 0.0
    %333 = vmatmul.mubr.f32.gmra.mrb[0].mxu0 %v156
    %v334 = vpop.f32.mrb[0].mxu0
    %v335 = vadd.f32 0.0, %v334
    %v336 = vpop.f32.mrb[0].mxu0
    %337 = vdwg.mxu0
    %v338 = vld [vmem:[%s2] sm:$0xff]
    %v339 = vld [vmem:[%s2 + $0x8] sm:$0xff]
    %v340 = vld [vmem:[%s2 + $0x10] sm:$0xff]
    %v341 = vld [vmem:[%s2 + $0x18] sm:$0xff]
    %v342 = vld [vmem:[%s2 + $0x20] sm:$0xff]
    %v343 = vld [vmem:[%s2 + $0x28] sm:$0xff]
    %v344 = vld [vmem:[%s2 + $0x30] sm:$0xff]
    %v345 = vld [vmem:[%s2 + $0x38] sm:$0xff]
    %vm346 = vcmask 261120
    %v348 = vsel %vm346, %v260, 0
    %v351 = vsel %vm346, %v265, 0
    %v354 = vsel %vm346, %v270, 0
    %v357 = vsel %vm346, %v275, 0
    %359 = vmatprep.subr.mxu0 0.0
    %360 = vmatpush1.msra.mxu0 %v342
    %361 = vmatprep.subr.mxu0 0.0
    %362 = vmatpush1.msra.mxu0 %v343
    %363 = vmatprep.subr.mxu0 0.0
    %364 = vmatpush1.msra.mxu0 %v344
    %365 = vmatprep.subr.mxu0 0.0
    %366 = vmatpush1.msra.mxu0 %v345
    %367 = vmatprep.subr.mxu0 0.0
    %368 = vmatpush1.msra.mxu0 0.0
    %369 = vmatprep.subr.mxu0 0.0
    %370 = vmatpush1.msra.mxu0 0.0
    %371 = vmatprep.subr.mxu0 0.0
    %372 = vmatpush1.msra.mxu0 0.0
    %373 = vmatprep.subr.mxu0 0.0
    %374 = vmatpush1.msra.mxu0 0.0
    %375 = vmatprep.subr.mxu0 0.0
    %376 = vmatpush1.msra.mxu0 0.0
    %377 = vmatprep.subr.mxu0 0.0
    %378 = vmatpush1.msra.mxu0 0.0
    %379 = vmatprep.subr.mxu0 0.0
    %380 = vmatpush1.msra.mxu0 0.0
    %381 = vmatprep.subr.mxu0 0.0
    %382 = vmatpush1.msra.mxu0 0.0
    %383 = vmatprep.subr.mxu0 0.0
    %384 = vmatpush1.msra.mxu0 0.0
    %385 = vmatprep.subr.mxu0 0.0
    %386 = vmatpush1.msra.mxu0 0.0
    %387 = vmatprep.subr.mxu0 0.0
    %388 = vmatpush1.msra.mxu0 0.0
    %389 = vmatprep.subr.mxu0 0.0
    %390 = vmatpush1.msra.mxu0 0.0
    %391 = vmatprep.subr.mxu0 0.0
    %392 = vmatpush1.msra.mxu0 0.0
    %393 = vmatprep.subr.mxu0 0.0
    %394 = vmatpush1.msra.mxu0 0.0
    %395 = vmatprep.subr.mxu0 0.0
    %396 = vmatpush1.msra.mxu0 0.0
    %397 = vmatprep.subr.mxu0 0.0
    %398 = vmatpush1.msra.mxu0 0.0
    %399 = vmatprep.subr.mxu0 0.0
    %400 = vmatpush1.msra.mxu0 0.0
    %401 = vmatprep.subr.mxu0 0.0
    %402 = vmatpush1.msra.mxu0 0.0
    %403 = vmatprep.subr.mxu0 0.0
    %404 = vmatpush1.msra.mxu0 0.0
    %405 = vmatprep.subr.mxu0 0.0
    %406 = vmatpush1.msra.mxu0 0.0
    %407 = vmatprep.subr.mxu0 0.0
    %408 = vmatpush1.msra.mxu0 0.0
    %409 = vmatprep.subr.mxu0 0.0
    %410 = vmatpush1.msra.mxu0 0.0
    %411 = vmatprep.subr.mxu0 0.0
    %412 = vmatpush1.msra.mxu0 0.0
    %413 = vmatprep.subr.mxu0 0.0
    %414 = vmatpush1.msra.mxu0 0.0
    %415 = vmatprep.subr.mxu0 0.0
    %416 = vmatpush1.msra.mxu0 0.0
    %417 = vmatprep.subr.mxu0 0.0
    %418 = vmatpush1.msra.mxu0 0.0
    %419 = vmatprep.subr.mxu0 0.0
    %420 = vmatpush1.msra.mxu0 0.0
    %421 = vmatprep.subr.mxu0 0.0
    %422 = vmatpush1.msra.mxu0 0.0
    %423 = vmatprep.mubr.f32.mxu0 0.0
    %424 = vmatmul.mubr.f32.gmra.mrb[0].mxu0 %v348
    %v425 = vpop.f32.mrb[0].mxu0
    %v426 = vadd.f32 0.0, %v425
    %v427 = vpop.f32.mrb[0].mxu0
    %428 = vmatprep.mubr.f32.mxu0 0.0
    %429 = vmatmul.mubr.f32.gmra.mrb[0].mxu0 %v351
    %v430 = vpop.f32.mrb[0].mxu0
    %v431 = vadd.f32 0.0, %v430
    %v432 = vpop.f32.mrb[0].mxu0
    %433 = vmatprep.mubr.f32.mxu0 0.0
    %434 = vmatmul.mubr.f32.gmra.mrb[0].mxu0 %v354
    %v435 = vpop.f32.mrb[0].mxu0
    %v436 = vadd.f32 0.0, %v435
    %v437 = vpop.f32.mrb[0].mxu0
    %438 = vmatprep.mubr.f32.mxu0 0.0
    %439 = vmatmul.mubr.f32.gmra.mrb[0].mxu0 %v357
    %v440 = vpop.f32.mrb[0].mxu0
    %v441 = vadd.f32 0.0, %v440
    %v442 = vpop.f32.mrb[0].mxu0
    %443 = vdwg.mxu0
    %v445 = vsel %vm346, %v240, 0
    %v448 = vsel %vm346, %v245, 0
    %v451 = vsel %vm346, %v250, 0
    %v454 = vsel %vm346, %v255, 0
    %456 = vmatprep.subr.mxu0 0.0
    %457 = vmatpush1.msra.mxu0 %v338
    %458 = vmatprep.subr.mxu0 0.0
    %459 = vmatpush1.msra.mxu0 %v339
    %460 = vmatprep.subr.mxu0 0.0
    %461 = vmatpush1.msra.mxu0 %v340
    %462 = vmatprep.subr.mxu0 0.0
    %463 = vmatpush1.msra.mxu0 %v341
    %464 = vmatprep.subr.mxu0 0.0
    %465 = vmatpush1.msra.mxu0 0.0
    %466 = vmatprep.subr.mxu0 0.0
    %467 = vmatpush1.msra.mxu0 0.0
    %468 = vmatprep.subr.mxu0 0.0
    %469 = vmatpush1.msra.mxu0 0.0
    %470 = vmatprep.subr.mxu0 0.0
    %471 = vmatpush1.msra.mxu0 0.0
    %472 = vmatprep.subr.mxu0 0.0
    %473 = vmatpush1.msra.mxu0 0.0
    %474 = vmatprep.subr.mxu0 0.0
    %475 = vmatpush1.msra.mxu0 0.0
    %476 = vmatprep.subr.mxu0 0.0
    %477 = vmatpush1.msra.mxu0 0.0
    %478 = vmatprep.subr.mxu0 0.0
    %479 = vmatpush1.msra.mxu0 0.0
    %480 = vmatprep.subr.mxu0 0.0
    %481 = vmatpush1.msra.mxu0 0.0
    %482 = vmatprep.subr.mxu0 0.0
    %483 = vmatpush1.msra.mxu0 0.0
    %484 = vmatprep.subr.mxu0 0.0
    %485 = vmatpush1.msra.mxu0 0.0
    %486 = vmatprep.subr.mxu0 0.0
    %487 = vmatpush1.msra.mxu0 0.0
    %488 = vmatprep.subr.mxu0 0.0
    %489 = vmatpush1.msra.mxu0 0.0
    %490 = vmatprep.subr.mxu0 0.0
    %491 = vmatpush1.msra.mxu0 0.0
    %492 = vmatprep.subr.mxu0 0.0
    %493 = vmatpush1.msra.mxu0 0.0
    %494 = vmatprep.subr.mxu0 0.0
    %495 = vmatpush1.msra.mxu0 0.0
    %496 = vmatprep.subr.mxu0 0.0
    %497 = vmatpush1.msra.mxu0 0.0
    %498 = vmatprep.subr.mxu0 0.0
    %499 = vmatpush1.msra.mxu0 0.0
    %500 = vmatprep.subr.mxu0 0.0
    %501 = vmatpush1.msra.mxu0 0.0
    %502 = vmatprep.subr.mxu0 0.0
    %503 = vmatpush1.msra.mxu0 0.0
    %504 = vmatprep.subr.mxu0 0.0
    %505 = vmatpush1.msra.mxu0 0.0
    %506 = vmatprep.subr.mxu0 0.0
    %507 = vmatpush1.msra.mxu0 0.0
    %508 = vmatprep.subr.mxu0 0.0
    %509 = vmatpush1.msra.mxu0 0.0
    %510 = vmatprep.subr.mxu0 0.0
    %511 = vmatpush1.msra.mxu0 0.0
    %512 = vmatprep.subr.mxu0 0.0
    %513 = vmatpush1.msra.mxu0 0.0
    %514 = vmatprep.subr.mxu0 0.0
    %515 = vmatpush1.msra.mxu0 0.0
    %516 = vmatprep.subr.mxu0 0.0
    %517 = vmatpush1.msra.mxu0 0.0
    %518 = vmatprep.subr.mxu0 0.0
    %519 = vmatpush1.msra.mxu0 0.0
    %520 = vmatprep.mubr.f32.mxu0 0.0
    %521 = vmatmul.mubr.f32.gmra.mrb[0].mxu0 %v445
    %v522 = vpop.f32.mrb[0].mxu0
    %v523 = vadd.f32 %v426, %v522
    %v524 = vpop.f32.mrb[0].mxu0
    %525 = vmatprep.mubr.f32.mxu0 0.0
    %526 = vmatmul.mubr.f32.gmra.mrb[0].mxu0 %v448
    %v527 = vpop.f32.mrb[0].mxu0
    %v528 = vadd.f32 %v431, %v527
    %v529 = vpop.f32.mrb[0].mxu0
    %530 = vmatprep.mubr.f32.mxu0 0.0
    %531 = vmatmul.mubr.f32.gmra.mrb[0].mxu0 %v451
    %v532 = vpop.f32.mrb[0].mxu0
    %v533 = vadd.f32 %v436, %v532
    %v534 = vpop.f32.mrb[0].mxu0
    %535 = vmatprep.mubr.f32.mxu0 0.0
    %536 = vmatmul.mubr.f32.gmra.mrb[0].mxu0 %v454
    %v537 = vpop.f32.mrb[0].mxu0
    %v538 = vadd.f32 %v441, %v537
    %v539 = vpop.f32.mrb[0].mxu0
    %540 = vdwg.mxu0
    %v541 = vld [vmem:[%s2 + $0x40] sm:$0xff]
    %v542 = vld [vmem:[%s2 + $0x48] sm:$0xff]
    %v543 = vld [vmem:[%s2 + $0x50] sm:$0xff]
    %v544 = vld [vmem:[%s2 + $0x58] sm:$0xff]
    %v546 = vsel %vm346, %v280, 0
    %v549 = vsel %vm346, %v285, 0
    %v552 = vsel %vm346, %v290, 0
    %v555 = vsel %vm346, %v295, 0
    %557 = vmatprep.subr.mxu0 0.0
    %558 = vmatpush1.msra.mxu0 %v541
    %559 = vmatprep.subr.mxu0 0.0
    %560 = vmatpush1.msra.mxu0 %v542
    %561 = vmatprep.subr.mxu0 0.0
    %562 = vmatpush1.msra.mxu0 %v543
    %563 = vmatprep.subr.mxu0 0.0
    %564 = vmatpush1.msra.mxu0 %v544
    %565 = vmatprep.subr.mxu0 0.0
    %566 = vmatpush1.msra.mxu0 0.0
    %567 = vmatprep.subr.mxu0 0.0
    %568 = vmatpush1.msra.mxu0 0.0
    %569 = vmatprep.subr.mxu0 0.0
    %570 = vmatpush1.msra.mxu0 0.0
    %571 = vmatprep.subr.mxu0 0.0
    %572 = vmatpush1.msra.mxu0 0.0
    %573 = vmatprep.subr.mxu0 0.0
    %574 = vmatpush1.msra.mxu0 0.0
    %575 = vmatprep.subr.mxu0 0.0
    %576 = vmatpush1.msra.mxu0 0.0
    %577 = vmatprep.subr.mxu0 0.0
    %578 = vmatpush1.msra.mxu0 0.0
    %579 = vmatprep.subr.mxu0 0.0
    %580 = vmatpush1.msra.mxu0 0.0
    %581 = vmatprep.subr.mxu0 0.0
    %582 = vmatpush1.msra.mxu0 0.0
    %583 = vmatprep.subr.mxu0 0.0
    %584 = vmatpush1.msra.mxu0 0.0
    %585 = vmatprep.subr.mxu0 0.0
    %586 = vmatpush1.msra.mxu0 0.0
    %587 = vmatprep.subr.mxu0 0.0
    %588 = vmatpush1.msra.mxu0 0.0
    %589 = vmatprep.subr.mxu0 0.0
    %590 = vmatpush1.msra.mxu0 0.0
    %591 = vmatprep.subr.mxu0 0.0
    %592 = vmatpush1.msra.mxu0 0.0
    %593 = vmatprep.subr.mxu0 0.0
    %594 = vmatpush1.msra.mxu0 0.0
    %595 = vmatprep.subr.mxu0 0.0
    %596 = vmatpush1.msra.mxu0 0.0
    %597 = vmatprep.subr.mxu0 0.0
    %598 = vmatpush1.msra.mxu0 0.0
    %599 = vmatprep.subr.mxu0 0.0
    %600 = vmatpush1.msra.mxu0 0.0
    %601 = vmatprep.subr.mxu0 0.0
    %602 = vmatpush1.msra.mxu0 0.0
    %603 = vmatprep.subr.mxu0 0.0
    %604 = vmatpush1.msra.mxu0 0.0
    %605 = vmatprep.subr.mxu0 0.0
    %606 = vmatpush1.msra.mxu0 0.0
    %607 = vmatprep.subr.mxu0 0.0
    %608 = vmatpush1.msra.mxu0 0.0
    %609 = vmatprep.subr.mxu0 0.0
    %610 = vmatpush1.msra.mxu0 0.0
    %611 = vmatprep.subr.mxu0 0.0
    %612 = vmatpush1.msra.mxu0 0.0
    %613 = vmatprep.subr.mxu0 0.0
    %614 = vmatpush1.msra.mxu0 0.0
    %615 = vmatprep.subr.mxu0 0.0
    %616 = vmatpush1.msra.mxu0 0.0
    %617 = vmatprep.subr.mxu0 0.0
    %618 = vmatpush1.msra.mxu0 0.0
    %619 = vmatprep.subr.mxu0 0.0
    %620 = vmatpush1.msra.mxu0 0.0
    %621 = vmatprep.mubr.f32.mxu0 0.0
    %622 = vmatmul.mubr.f32.gmra.mrb[0].mxu0 %v546
    %v623 = vpop.f32.mrb[0].mxu0
    %v624 = vadd.f32 0.0, %v623
    %v625 = vpop.f32.mrb[0].mxu0
    %626 = vmatprep.mubr.f32.mxu0 0.0
    %627 = vmatmul.mubr.f32.gmra.mrb[0].mxu0 %v549
    %v628 = vpop.f32.mrb[0].mxu0
    %v629 = vadd.f32 0.0, %v628
    %v630 = vpop.f32.mrb[0].mxu0
    %631 = vmatprep.mubr.f32.mxu0 0.0
    %632 = vmatmul.mubr.f32.gmra.mrb[0].mxu0 %v552
    %v633 = vpop.f32.mrb[0].mxu0
    %v634 = vadd.f32 0.0, %v633
    %v635 = vpop.f32.mrb[0].mxu0
    %636 = vmatprep.mubr.f32.mxu0 0.0
    %637 = vmatmul.mubr.f32.gmra.mrb[0].mxu0 %v555
    %v638 = vpop.f32.mrb[0].mxu0
    %v639 = vadd.f32 0.0, %v638
    %v640 = vpop.f32.mrb[0].mxu0
    %641 = vdwg.mxu0
    %v642 = vadd.f32 %v523, %v624
    %v643 = vadd.f32 %v528, %v629
    %v644 = vadd.f32 %v533, %v634
    %v645 = vadd.f32 %v538, %v639
    %v646 = vld [vmem:[%s2 + $0x60] sm:$0xff]
    %v647 = vld [vmem:[%s2 + $0x68] sm:$0xff]
    %v648 = vld [vmem:[%s2 + $0x70] sm:$0xff]
    %v649 = vld [vmem:[%s2 + $0x78] sm:$0xff]
    %v651 = vsel %vm346, %v300, 0
    %v654 = vsel %vm346, %v305, 0
    %v657 = vsel %vm346, %v310, 0
    %v660 = vsel %vm346, %v315, 0
    %662 = vmatprep.subr.mxu0 0.0
    %663 = vmatpush1.msra.mxu0 %v646
    %664 = vmatprep.subr.mxu0 0.0
    %665 = vmatpush1.msra.mxu0 %v647
    %666 = vmatprep.subr.mxu0 0.0
    %667 = vmatpush1.msra.mxu0 %v648
    %668 = vmatprep.subr.mxu0 0.0
    %669 = vmatpush1.msra.mxu0 %v649
    %670 = vmatprep.subr.mxu0 0.0
    %671 = vmatpush1.msra.mxu0 0.0
    %672 = vmatprep.subr.mxu0 0.0
    %673 = vmatpush1.msra.mxu0 0.0
    %674 = vmatprep.subr.mxu0 0.0
    %675 = vmatpush1.msra.mxu0 0.0
    %676 = vmatprep.subr.mxu0 0.0
    %677 = vmatpush1.msra.mxu0 0.0
    %678 = vmatprep.subr.mxu0 0.0
    %679 = vmatpush1.msra.mxu0 0.0
    %680 = vmatprep.subr.mxu0 0.0
    %681 = vmatpush1.msra.mxu0 0.0
    %682 = vmatprep.subr.mxu0 0.0
    %683 = vmatpush1.msra.mxu0 0.0
    %684 = vmatprep.subr.mxu0 0.0
    %685 = vmatpush1.msra.mxu0 0.0
    %686 = vmatprep.subr.mxu0 0.0
    %687 = vmatpush1.msra.mxu0 0.0
    %688 = vmatprep.subr.mxu0 0.0
    %689 = vmatpush1.msra.mxu0 0.0
    %690 = vmatprep.subr.mxu0 0.0
    %691 = vmatpush1.msra.mxu0 0.0
    %692 = vmatprep.subr.mxu0 0.0
    %693 = vmatpush1.msra.mxu0 0.0
    %694 = vmatprep.subr.mxu0 0.0
    %695 = vmatpush1.msra.mxu0 0.0
    %696 = vmatprep.subr.mxu0 0.0
    %697 = vmatpush1.msra.mxu0 0.0
    %698 = vmatprep.subr.mxu0 0.0
    %699 = vmatpush1.msra.mxu0 0.0
    %700 = vmatprep.subr.mxu0 0.0
    %701 = vmatpush1.msra.mxu0 0.0
    %702 = vmatprep.subr.mxu0 0.0
    %703 = vmatpush1.msra.mxu0 0.0
    %704 = vmatprep.subr.mxu0 0.0
    %705 = vmatpush1.msra.mxu0 0.0
    %706 = vmatprep.subr.mxu0 0.0
    %707 = vmatpush1.msra.mxu0 0.0
    %708 = vmatprep.subr.mxu0 0.0
    %709 = vmatpush1.msra.mxu0 0.0
    %710 = vmatprep.subr.mxu0 0.0
    %711 = vmatpush1.msra.mxu0 0.0
    %712 = vmatprep.subr.mxu0 0.0
    %713 = vmatpush1.msra.mxu0 0.0
    %714 = vmatprep.subr.mxu0 0.0
    %715 = vmatpush1.msra.mxu0 0.0
    %716 = vmatprep.subr.mxu0 0.0
    %717 = vmatpush1.msra.mxu0 0.0
    %718 = vmatprep.subr.mxu0 0.0
    %719 = vmatpush1.msra.mxu0 0.0
    %720 = vmatprep.subr.mxu0 0.0
    %721 = vmatpush1.msra.mxu0 0.0
    %722 = vmatprep.subr.mxu0 0.0
    %723 = vmatpush1.msra.mxu0 0.0
    %724 = vmatprep.subr.mxu0 0.0
    %725 = vmatpush1.msra.mxu0 0.0
    %726 = vmatprep.mubr.f32.mxu0 0.0
    %727 = vmatmul.mubr.f32.gmra.mrb[0].mxu0 %v651
    %v728 = vpop.f32.mrb[0].mxu0
    %v729 = vadd.f32 0.0, %v728
    %v730 = vpop.f32.mrb[0].mxu0
    %731 = vmatprep.mubr.f32.mxu0 0.0
    %732 = vmatmul.mubr.f32.gmra.mrb[0].mxu0 %v654
    %v733 = vpop.f32.mrb[0].mxu0
    %v734 = vadd.f32 0.0, %v733
    %v735 = vpop.f32.mrb[0].mxu0
    %736 = vmatprep.mubr.f32.mxu0 0.0
    %737 = vmatmul.mubr.f32.gmra.mrb[0].mxu0 %v657
    %v738 = vpop.f32.mrb[0].mxu0
    %v739 = vadd.f32 0.0, %v738
    %v740 = vpop.f32.mrb[0].mxu0
    %741 = vmatprep.mubr.f32.mxu0 0.0
    %742 = vmatmul.mubr.f32.gmra.mrb[0].mxu0 %v660
    %v743 = vpop.f32.mrb[0].mxu0
    %v744 = vadd.f32 0.0, %v743
    %v745 = vpop.f32.mrb[0].mxu0
    %746 = vdwg.mxu0
    %v747 = vadd.f32 %v642, %v729
    %v748 = vadd.f32 %v643, %v734
    %v749 = vadd.f32 %v644, %v739
    %v750 = vadd.f32 %v645, %v744
    %v751 = vld [vmem:[%s2 + $0x80] sm:$0xff]
    %v752 = vld [vmem:[%s2 + $0x88] sm:$0xff]
    %v753 = vld [vmem:[%s2 + $0x90] sm:$0xff]
    %v754 = vld [vmem:[%s2 + $0x98] sm:$0xff]
    %v756 = vsel %vm346, %v320, 0
    %v759 = vsel %vm346, %v325, 0
    %v762 = vsel %vm346, %v330, 0
    %v765 = vsel %vm346, %v335, 0
    %767 = vmatprep.subr.mxu0 0.0
    %768 = vmatpush1.msra.mxu0 %v751
    %769 = vmatprep.subr.mxu0 0.0
    %770 = vmatpush1.msra.mxu0 %v752
    %771 = vmatprep.subr.mxu0 0.0
    %772 = vmatpush1.msra.mxu0 %v753
    %773 = vmatprep.subr.mxu0 0.0
    %774 = vmatpush1.msra.mxu0 %v754
    %775 = vmatprep.subr.mxu0 0.0
    %776 = vmatpush1.msra.mxu0 0.0
    %777 = vmatprep.subr.mxu0 0.0
    %778 = vmatpush1.msra.mxu0 0.0
    %779 = vmatprep.subr.mxu0 0.0
    %780 = vmatpush1.msra.mxu0 0.0
    %781 = vmatprep.subr.mxu0 0.0
    %782 = vmatpush1.msra.mxu0 0.0
    %783 = vmatprep.subr.mxu0 0.0
    %784 = vmatpush1.msra.mxu0 0.0
    %785 = vmatprep.subr.mxu0 0.0
    %786 = vmatpush1.msra.mxu0 0.0
    %787 = vmatprep.subr.mxu0 0.0
    %788 = vmatpush1.msra.mxu0 0.0
    %789 = vmatprep.subr.mxu0 0.0
    %790 = vmatpush1.msra.mxu0 0.0
    %791 = vmatprep.subr.mxu0 0.0
    %792 = vmatpush1.msra.mxu0 0.0
    %793 = vmatprep.subr.mxu0 0.0
    %794 = vmatpush1.msra.mxu0 0.0
    %795 = vmatprep.subr.mxu0 0.0
    %796 = vmatpush1.msra.mxu0 0.0
    %797 = vmatprep.subr.mxu0 0.0
    %798 = vmatpush1.msra.mxu0 0.0
    %799 = vmatprep.subr.mxu0 0.0
    %800 = vmatpush1.msra.mxu0 0.0
    %801 = vmatprep.subr.mxu0 0.0
    %802 = vmatpush1.msra.mxu0 0.0
    %803 = vmatprep.subr.mxu0 0.0
    %804 = vmatpush1.msra.mxu0 0.0
    %805 = vmatprep.subr.mxu0 0.0
    %806 = vmatpush1.msra.mxu0 0.0
    %807 = vmatprep.subr.mxu0 0.0
    %808 = vmatpush1.msra.mxu0 0.0
    %809 = vmatprep.subr.mxu0 0.0
    %810 = vmatpush1.msra.mxu0 0.0
    %811 = vmatprep.subr.mxu0 0.0
    %812 = vmatpush1.msra.mxu0 0.0
    %813 = vmatprep.subr.mxu0 0.0
    %814 = vmatpush1.msra.mxu0 0.0
    %815 = vmatprep.subr.mxu0 0.0
    %816 = vmatpush1.msra.mxu0 0.0
    %817 = vmatprep.subr.mxu0 0.0
    %818 = vmatpush1.msra.mxu0 0.0
    %819 = vmatprep.subr.mxu0 0.0
    %820 = vmatpush1.msra.mxu0 0.0
    %821 = vmatprep.subr.mxu0 0.0
    %822 = vmatpush1.msra.mxu0 0.0
    %823 = vmatprep.subr.mxu0 0.0
    %824 = vmatpush1.msra.mxu0 0.0
    %825 = vmatprep.subr.mxu0 0.0
    %826 = vmatpush1.msra.mxu0 0.0
    %827 = vmatprep.subr.mxu0 0.0
    %828 = vmatpush1.msra.mxu0 0.0
    %829 = vmatprep.subr.mxu0 0.0
    %830 = vmatpush1.msra.mxu0 0.0
    %831 = vmatprep.mubr.f32.mxu0 0.0
    %832 = vmatmul.mubr.f32.gmra.mrb[0].mxu0 %v756
    %v833 = vpop.f32.mrb[0].mxu0
    %v834 = vadd.f32 0.0, %v833
    %v835 = vpop.f32.mrb[0].mxu0
    %836 = vmatprep.mubr.f32.mxu0 0.0
    %837 = vmatmul.mubr.f32.gmra.mrb[0].mxu0 %v759
    %v838 = vpop.f32.mrb[0].mxu0
    %v839 = vadd.f32 0.0, %v838
    %v840 = vpop.f32.mrb[0].mxu0
    %841 = vmatprep.mubr.f32.mxu0 0.0
    %842 = vmatmul.mubr.f32.gmra.mrb[0].mxu0 %v762
    %v843 = vpop.f32.mrb[0].mxu0
    %v844 = vadd.f32 0.0, %v843
    %v845 = vpop.f32.mrb[0].mxu0
    %846 = vmatprep.mubr.f32.mxu0 0.0
    %847 = vmatmul.mubr.f32.gmra.mrb[0].mxu0 %v765
    %v848 = vpop.f32.mrb[0].mxu0
    %v849 = vadd.f32 0.0, %v848
    %v850 = vpop.f32.mrb[0].mxu0
    %851 = vdwg.mxu0
    %v852 = vadd.f32 %v747, %v834
    %v853 = vadd.f32 %v748, %v839
    %v854 = vadd.f32 %v749, %v844
    %v855 = vadd.f32 %v750, %v849
    %v856 = vld [vmem:[%s2 + $0xa0] sm:$0x1]
    %v857 = vlaneseq
    %v858 = vshrl.u32 %v857, 7
    %v859 = vsub.s32 0, %v858
    %v860 = vrot.slane %v856, %v859
    %v861 = vadd.f32 %v852, %v860
    %v862 = vadd.f32 %v853, %v860
    %v863 = vadd.f32 %v854, %v860
    %v864 = vadd.f32 %v855, %v860
    %v865 = vmax.f32 %v861, 0.0
    %v866 = vmax.f32 %v862, 0.0
    %v867 = vmax.f32 %v863, 0.0
    %v868 = vmax.f32 %v864, 0.0
    %v869 = vld [vmem:[%s2 + $0xa8] sm:$0xff]
    %v870 = vld [vmem:[%s2 + $0xb0] sm:$0xff]
    %v871 = vmul.f32 %v865, %v869
    %v872 = vmul.f32 %v866, %v870
    %v873 = vmax.f32 %v871, %v872
    %v874 = vrot.slane %v873, 4
    %v875 = vmax.f32 %v873, %v874
    %v876 = vrot.slane %v875, 2
    %v877 = vmax.f32 %v875, %v876
    %v878 = vrot.slane %v877, 1
    %v879 = vmax.f32 %v877, %v878
    %v880 = vmul.f32 %v867, %v869
    %v881 = vmul.f32 %v868, %v870
    %v882 = vmax.f32 %v880, %v881
    %v883 = vrot.slane %v882, 4
    %v884 = vmax.f32 %v882, %v883
    %v885 = vrot.slane %v884, 2
    %v886 = vmax.f32 %v884, %v885
    %v887 = vrot.slane %v886, 1
    %v888 = vmax.f32 %v886, %v887
    %vm889 = vcmask 1040384
    %v890 = vsel %vm889, %v879, %v888
    %v891 = vld [vmem:[%s2 + $0xb8] sm:$0xff]
    %v892 = vld [vmem:[%s2 + $0xc0] sm:$0xff]
    %v893 = vld [vmem:[%s2 + $0xc8] sm:$0xff]
    %v894 = vld [vmem:[%s2 + $0xd0] sm:$0xff]
    %v895 = vld [vmem:[%s2 + $0xd8] sm:$0xff]
    %v896 = vld [vmem:[%s2 + $0xe0] sm:$0xff]
    %v897 = vld [vmem:[%s2 + $0xe8] sm:$0xff]
    %v898 = vld [vmem:[%s2 + $0xf0] sm:$0xff]
    %v899 = vld [vmem:[%s2 + $0xf8] sm:$0xff]
    %v900 = vld [vmem:[%s2 + $0x100] sm:$0xff]
    %v901 = vld [vmem:[%s2 + $0x108] sm:$0xff]
    %v902 = vld [vmem:[%s2 + $0x110] sm:$0xff]
    %v903 = vld [vmem:[%s2 + $0x118] sm:$0xff]
    %v904 = vld [vmem:[%s2 + $0x120] sm:$0xff]
    %v905 = vld [vmem:[%s2 + $0x128] sm:$0xff]
    %v906 = vld [vmem:[%s2 + $0x130] sm:$0xff]
    %v907 = vld [vmem:[%s2 + $0x138] sm:$0x1]
    %v908 = vlaneseq
    %v909 = vshrl.u32 %v908, 7
    %v910 = vsub.s32 0, %v909
    %v911 = vrot.slane %v907, %v910
    %912 = vmatprep.subr.mxu0 0.0
    %913 = vmatpush1.msra.mxu0 %v891
    %914 = vmatprep.subr.mxu0 0.0
    %915 = vmatpush1.msra.mxu0 %v892
    %916 = vmatprep.subr.mxu0 0.0
    %917 = vmatpush1.msra.mxu0 %v893
    %918 = vmatprep.subr.mxu0 0.0
    %919 = vmatpush1.msra.mxu0 %v894
    %920 = vmatprep.subr.mxu0 0.0
    %921 = vmatpush1.msra.mxu0 %v895
    %922 = vmatprep.subr.mxu0 0.0
    %923 = vmatpush1.msra.mxu0 %v896
    %924 = vmatprep.subr.mxu0 0.0
    %925 = vmatpush1.msra.mxu0 %v897
    %926 = vmatprep.subr.mxu0 0.0
    %927 = vmatpush1.msra.mxu0 %v898
    %928 = vmatprep.subr.mxu0 0.0
    %929 = vmatpush1.msra.mxu0 %v899
    %930 = vmatprep.subr.mxu0 0.0
    %931 = vmatpush1.msra.mxu0 %v900
    %932 = vmatprep.subr.mxu0 0.0
    %933 = vmatpush1.msra.mxu0 %v901
    %934 = vmatprep.subr.mxu0 0.0
    %935 = vmatpush1.msra.mxu0 %v902
    %936 = vmatprep.subr.mxu0 0.0
    %937 = vmatpush1.msra.mxu0 %v903
    %938 = vmatprep.subr.mxu0 0.0
    %939 = vmatpush1.msra.mxu0 %v904
    %940 = vmatprep.subr.mxu0 0.0
    %941 = vmatpush1.msra.mxu0 %v905
    %942 = vmatprep.subr.mxu0 0.0
    %943 = vmatpush1.msra.mxu0 %v906
    %944 = vmatprep.subr.mxu0 0.0
    %945 = vmatpush1.msra.mxu0 0.0
    %946 = vmatprep.subr.mxu0 0.0
    %947 = vmatpush1.msra.mxu0 0.0
    %948 = vmatprep.subr.mxu0 0.0
    %949 = vmatpush1.msra.mxu0 0.0
    %950 = vmatprep.subr.mxu0 0.0
    %951 = vmatpush1.msra.mxu0 0.0
    %952 = vmatprep.subr.mxu0 0.0
    %953 = vmatpush1.msra.mxu0 0.0
    %954 = vmatprep.subr.mxu0 0.0
    %955 = vmatpush1.msra.mxu0 0.0
    %956 = vmatprep.subr.mxu0 0.0
    %957 = vmatpush1.msra.mxu0 0.0
    %958 = vmatprep.subr.mxu0 0.0
    %959 = vmatpush1.msra.mxu0 0.0
    %960 = vmatprep.subr.mxu0 0.0
    %961 = vmatpush1.msra.mxu0 0.0
    %962 = vmatprep.subr.mxu0 0.0
    %963 = vmatpush1.msra.mxu0 0.0
    %964 = vmatprep.subr.mxu0 0.0
    %965 = vmatpush1.msra.mxu0 0.0
    %966 = vmatprep.subr.mxu0 0.0
    %967 = vmatpush1.msra.mxu0 0.0
    %968 = vmatprep.subr.mxu0 0.0
    %969 = vmatpush1.msra.mxu0 0.0
    %970 = vmatprep.subr.mxu0 0.0
    %971 = vmatpush1.msra.mxu0 0.0
    %972 = vmatprep.subr.mxu0 0.0
    %973 = vmatpush1.msra.mxu0 0.0
    %974 = vmatprep.subr.mxu0 0.0
    %975 = vmatpush1.msra.mxu0 0.0
    %976 = vmatprep.mubr.f32.mxu0 0.0
    %977 = vmatmul.mubr.f32.gmra.mrb[0].mxu0 %v890
    %v978 = vpop.f32.mrb[0].mxu0
    %v979 = vadd.f32 %v911, %v978
    %v980 = vpop.f32.mrb[0].mxu0
    %981 = vdwg.mxu0
    %982 = vst [vmem:[#allocation2] sm:$0x3] %v979
    // Predicated region
    $region14: #{tpu_custom_call.1} parent=1 // pred_check
      _
    $region15: #{tpu_custom_call.1} parent=1 // pred_check_branch
      %984 = sbr.rel (0) target = $region17
    $region16: #{tpu_custom_call.1} parent=1 // pred_region
      %s986 = ssub.s32 32, 32
      %987 = vsyncadd [#allocation3], %s986
      %s989 = sshll.u32 [#allocation2], 4
      %s990 = int_to_ptr.vmem [resolvable:$true] %s989
      %992 = dma.vmem_to_hbm [thread:$0]  %s990, 32, %s3, [#allocation3]
    $region17: #{tpu_custom_call.1} parent=1 // pred_fallthru
      _
    // Predicated region
    $region18: #{tpu_custom_call.1} parent=1 // pred_check
      _
    $region19: #{tpu_custom_call.1} parent=1 // pred_check_branch
      %994 = sbr.rel (0) target = $region21
    $region20: #{tpu_custom_call.1} parent=1 // pred_region
      %995 = dma.done [#allocation3], 32
    $region21: #{tpu_custom_call.1} parent=1 // pred_fallthru
      _
    %996 = vsyncpa [#allocation3], 1

</llo_original>
